<compile_context>
chip_gen: v5e
topology: v5e:2x2
jax: 0.10.0
libtpu: 0.0.40
codegen_flags: <defaults>
</compile_context>

<pallas_src>
import jax
import jax.numpy as jnp
from jax.experimental import pallas as pl
from jax.experimental.pallas import tpu as pltpu


def _hmaxpool_kernel(x_ref, o_ref):
    # x_ref: (bc, th, W) -> o_ref: (bc, th)   lane-dense output, W-reduce (XLU)
    o_ref[...] = jnp.max(x_ref[...], axis=-1)
    # TODO(synk): for W < 128 a packed-lane (bc, H*W) variant with a roll/max
    # tree would avoid the 128/W lane-padding waste; only worth it if profiling
    # shows the vld slot / VPU saturating before HBM bandwidth.


def _round_up(x, m):
    return ((x + m - 1) // m) * m


def _sublane_align(dtype):
    # Native sublane tiling: 8 rows for 4-byte, 16 for 2-byte, 32 for 1-byte.
    return max(8, 32 // jnp.dtype(dtype).itemsize)


def _target_tile_bytes():
    # ~8 MiB padded input tiles on v7x (3.2 TB/s/TC hides the fixed per-step
    # cost), ~4 MiB on v5e/v6e.
    try:
        kind = jax.devices()[0].device_kind.lower()
    except Exception:
        kind = ""
    return (8 << 20) if "7" in kind else (4 << 20)


def _pick_tiles(nc, h, w, dtype):
    """Choose (bc, th): (N*C)-planes per grid step and H-rows per grid step.

    All sizing uses PADDED VMEM footprints (sublane/lane tiling) so the
    double-buffered tiles stay inside default scoped VMEM on every generation.
    """
    itemsize = jnp.dtype(dtype).itemsize
    al = _sublane_align(dtype)
    w_pad = _round_up(w, 128)
    target = _target_tile_bytes()
    budget = 24 << 20  # padded, double-buffered (in + out) ceiling

    def in_bytes(bc, th):
        return bc * _round_up(th, al) * w_pad * itemsize

    def out_bytes(bc, th):
        return _round_up(bc, al) * _round_up(th, 128) * itemsize

    def total(bc, th):
        return 2 * (in_bytes(bc, th) + out_bytes(bc, th))

    # ---- planes per step (full H) ----
    plane = in_bytes(1, h)
    cap = max(1, target // max(plane, 1))
    cap = min(cap, nc)
    if nc >= 2 * al:
        # Keep >= 2 grid steps so the parallel axis can shard over v7x's 2 TCs.
        cap = min(cap, _round_up(-(-nc // 2), al))
    if cap >= al:
        bc = (cap // al) * al          # sublane-aligned; partial last block ok
    elif nc <= al:
        bc = nc                        # tiny problem: one full-extent block
    else:
        bc = al                        # large planes: smallest aligned block

    if total(bc, h) <= budget:
        return bc, h

    # ---- planes too large even at minimal bc: tile H as well ----
    bc = nc if nc <= al else al
    if h <= 128:
        # Can't usefully tile H (output last dim must stay 128-aligned or full).
        # TODO(synk): add a W-chunked running-max reduction for extreme-W planes.
        return bc, h
    th = 128
    while 2 * th < h and total(bc, 2 * th) <= budget:
        th *= 2
    return bc, th


def horizontal_max_pool2d(x, *, min_pallas_bytes=1 << 20):
    """Equivalent of nn.functional.max_pool2d(x, kernel_size=(1, W)).

    Input  x: (N, C, H, W)
    Output  : (N, C, H, 1)
    """
    N, C, H, W = x.shape
    NC = N * C
    itemsize = jnp.dtype(x.dtype).itemsize

    # Tiny-input fast path: kernel-launch + pipeline fixed costs dominate.
    if NC * H * W * itemsize < min_pallas_bytes:
        return jnp.max(x, axis=3, keepdims=True)

    x2 = x.reshape(NC, H, W)
    bc, th = _pick_tiles(NC, H, W, x.dtype)
    grid = (pl.cdiv(NC, bc), pl.cdiv(H, th))

    # VMEM limit from the padded, double-buffered footprint (+ margin).
    al = _sublane_align(x.dtype)
    in_pad = bc * _round_up(th, al) * _round_up(W, 128) * itemsize
    out_pad = _round_up(bc, al) * _round_up(th, 128) * itemsize
    vmem_bytes = 2 * (in_pad + out_pad) + (2 << 20)
    vmem_bytes = min(max(vmem_bytes, 16 << 20), 48 << 20)

    out = pl.pallas_call(
        _hmaxpool_kernel,
        out_shape=jax.ShapeDtypeStruct((NC, H), x.dtype),
        grid=grid,
        in_specs=[pl.BlockSpec((bc, th, W), lambda i, j: (i, j, 0))],
        out_specs=pl.BlockSpec((bc, th), lambda i, j: (i, j)),
        compiler_params=pltpu.CompilerParams(
            dimension_semantics=("parallel", "parallel"),
            vmem_limit_bytes=vmem_bytes,
        ),
    )(x2)

    return out.reshape(N, C, H, 1)


if __name__ == "__main__":
    key = jax.random.PRNGKey(0)
    N, C, H, W = 2, 4, 16, 16
    x = jax.random.normal(key, (N, C, H, W), dtype=jnp.float32)

    ref = jnp.max(x, axis=3, keepdims=True)

    # Force the Pallas path even at this tiny test size (the default would take
    # the XLA fast path for sub-MiB inputs).
    y = horizontal_max_pool2d(x, min_pallas_bytes=0)
    jax.block_until_ready(y)
    assert y.shape == (N, C, H, 1), y.shape
    assert jnp.allclose(y, ref), "Pallas kernel mismatch vs reference"

    # The default (fast-path) call must agree too.
    y_fast = horizontal_max_pool2d(x)
    jax.block_until_ready(y_fast)
    assert jnp.allclose(y_fast, ref), "fast path mismatch vs reference"

    print("KERNEL_OK")
</pallas_src>

<mosaic_0001>
module attributes {stable_mosaic.version = 11 : i64} {
  func.func @_hmaxpool_kernel(%arg0: i32, %arg1: i32, %arg2: memref<8x16x16xf32, #tpu.memory_space<vmem>>, %arg3: memref<8x16xf32, #tpu.memory_space<vmem>>) attributes {dimension_semantics = [#tpu.dimension_semantics<parallel>, #tpu.dimension_semantics<parallel>], iteration_bounds = array<i64: 1, 1>, scalar_prefetch = 0 : i64, scratch_operands = 0 : i64, tpu.core_type = #tpu.core_type<tc>, window_params = [{transform_indices = @transform_0, window_bounds = array<i64: 8, 16, 16>}, {transform_indices = @transform_1, window_bounds = array<i64: 8, 16>}]} {
    %c0 = arith.constant 0 : index
    %c0_0 = arith.constant 0 : index
    %c0_1 = arith.constant 0 : index
    %0 = vector.load %arg2[%c0, %c0_0, %c0_1] : memref<8x16x16xf32, #tpu.memory_space<vmem>>, vector<8x16x16xf32>
    %cst = arith.constant dense<0xFF800000> : vector<8x16xf32>
    %1 = vector.multi_reduction <maximumf>, %0, %cst [2] : vector<8x16x16xf32> to vector<8x16xf32>
    %c0_2 = arith.constant 0 : index
    %c0_3 = arith.constant 0 : index
    %2 = vector.load %arg3[%c0_2, %c0_3] : memref<8x16xf32, #tpu.memory_space<vmem>>, vector<8x16xf32>
    tpu.vector_store %arg3[%c0_2, %c0_3], %1 {strides = array<i32>} : memref<8x16xf32, #tpu.memory_space<vmem>>, vector<8x16xf32>,
    return
  }
  func.func @transform_0(%arg0: i32, %arg1: i32) -> (i32, i32, i32) {
    %c0_i32 = arith.constant 0 : i32
    %c0_i32_0 = arith.constant 0 : i32
    return %arg0, %arg1, %c0_i32 : i32, i32, i32
  }
  func.func @transform_1(%arg0: i32, %arg1: i32) -> (i32, i32) {
    %c0_i32 = arith.constant 0 : i32
    return %arg0, %arg1 : i32, i32
  }
}

</mosaic_0001>

<llo_original>
// kernel: tpu_custom_call.1
$region0: #{tpu_custom_call.1}
  #allocation0 [shape = 'u32[]', space=smem, size = 0x4, offset = 0x4, fixed_abs, tag = 'smem constant byte address 0x4 - core index']
  #allocation1 [shape = 'u32[72,128]{1,0:T(1,128)}', space=vmem, size = 0x9000, scoped, tag = 'internal scratch']
  %s0 = inlined_call_operand.hbm [shape: f32[8,16,16], index: 0, kind: input, shape index: {}]
  %s1 = inlined_call_operand.hbm [shape: f32[8,16], index: 1, kind: output, shape index: {}]
  %s2 = sld [smem:[#allocation0]]
  $region18: #{tpu_custom_call.1} parent=0
    _
  %s4 = ssub.s32 1, %s2
  %s5 = scalar_select 0, %s4, %s2
  $region1: #{tpu_custom_call.1} parent=0
    #allocation2 [shape = 'u8[65536]{0}', space=vmem, size = 0x10000, scoped, tag = 'input window, operand 0, single buffered']
    #allocation3 [shape = 's32[1]{0}', space=sflag, size = 0x4, scoped, tag = 'scoped memory for tpu_custom_call.1']
    #allocation4 [shape = 's32[1]{0}', space=sflag, size = 0x4, scoped, tag = 'scoped memory for tpu_custom_call.1']
    #allocation5 [shape = 'u8[4096]{0}', space=vmem, size = 0x1000, scoped, tag = 'output window, operand 0, single buffered']
    %6 = vsyncpa [#allocation3], 0
    %7 = vsyncpa [#allocation4], 0
    // Predicated region
    $region2: #{tpu_custom_call.1} parent=1 // pred_check
      _
    $region3: #{tpu_custom_call.1} parent=1 // pred_check_branch
      %9 = sbr.rel (0) target = $region5
    $region4: #{tpu_custom_call.1} parent=1 // pred_region
      %11 = vsyncadd [#allocation3], 0
      %s12 = sshll.u32 %s0, 4
      %s13 = int_to_ptr.hbm [resolvable:$true] %s12
      %s14 = sshll.u32 [#allocation2], 4
      %s15 = int_to_ptr.vmem [resolvable:$true] %s14
      %20 = dma.hbm_to_vmem [thread:$0]  %s13, 2048, %s15, [#allocation3], 128, 128, 8
    $region5: #{tpu_custom_call.1} parent=1 // pred_fallthru
      _
    // Predicated region
    $region6: #{tpu_custom_call.1} parent=1 // pred_check
      _
    $region7: #{tpu_custom_call.1} parent=1 // pred_check_branch
      %22 = sbr.rel (0) target = $region9
    $region8: #{tpu_custom_call.1} parent=1 // pred_region
      %24 = dma.done [#allocation3], 2048
    $region9: #{tpu_custom_call.1} parent=1 // pred_fallthru
      _
    %v25 = vld [vmem:[#allocation2] sm:$0xff]
    %v26 = vld [vmem:[#allocation2 + $0x8] sm:$0xff]
    %v27 = vld [vmem:[#allocation2 + $0x10] sm:$0xff]
    %v28 = vld [vmem:[#allocation2 + $0x18] sm:$0xff]
    %v29 = vld [vmem:[#allocation2 + $0x20] sm:$0xff]
    %v30 = vld [vmem:[#allocation2 + $0x28] sm:$0xff]
    %v31 = vld [vmem:[#allocation2 + $0x30] sm:$0xff]
    %v32 = vld [vmem:[#allocation2 + $0x38] sm:$0xff]
    %v33 = vld [vmem:[#allocation2 + $0x40] sm:$0xff]
    %v34 = vld [vmem:[#allocation2 + $0x48] sm:$0xff]
    %v35 = vld [vmem:[#allocation2 + $0x50] sm:$0xff]
    %v36 = vld [vmem:[#allocation2 + $0x58] sm:$0xff]
    %v37 = vld [vmem:[#allocation2 + $0x60] sm:$0xff]
    %v38 = vld [vmem:[#allocation2 + $0x68] sm:$0xff]
    %v39 = vld [vmem:[#allocation2 + $0x70] sm:$0xff]
    %v40 = vld [vmem:[#allocation2 + $0x78] sm:$0xff]
    %vm41 = vcmask 130048
    %v42 = vsel %vm41, %v25, -inf
    %43 = vmax.xlane.f32.xlu0 %v42
    %v44 = vpop.xlane.xlu0 %43
    %v45 = vsel %vm41, %v26, -inf
    %46 = vmax.xlane.f32.xlu0 %v45
    %v47 = vpop.xlane.xlu0 %46
    %v48 = vsel %vm41, %v27, -inf
    %49 = vmax.xlane.f32.xlu0 %v48
    %v50 = vpop.xlane.xlu0 %49
    %v51 = vsel %vm41, %v28, -inf
    %52 = vmax.xlane.f32.xlu0 %v51
    %v53 = vpop.xlane.xlu0 %52
    %v54 = vsel %vm41, %v29, -inf
    %55 = vmax.xlane.f32.xlu0 %v54
    %v56 = vpop.xlane.xlu0 %55
    %v57 = vsel %vm41, %v30, -inf
    %58 = vmax.xlane.f32.xlu0 %v57
    %v59 = vpop.xlane.xlu0 %58
    %v60 = vsel %vm41, %v31, -inf
    %61 = vmax.xlane.f32.xlu0 %v60
    %v62 = vpop.xlane.xlu0 %61
    %v63 = vsel %vm41, %v32, -inf
    %64 = vmax.xlane.f32.xlu0 %v63
    %v65 = vpop.xlane.xlu0 %64
    %v66 = vsel %vm41, %v33, -inf
    %67 = vmax.xlane.f32.xlu0 %v66
    %v68 = vpop.xlane.xlu0 %67
    %v69 = vsel %vm41, %v34, -inf
    %70 = vmax.xlane.f32.xlu0 %v69
    %v71 = vpop.xlane.xlu0 %70
    %v72 = vsel %vm41, %v35, -inf
    %73 = vmax.xlane.f32.xlu0 %v72
    %v74 = vpop.xlane.xlu0 %73
    %v75 = vsel %vm41, %v36, -inf
    %76 = vmax.xlane.f32.xlu0 %v75
    %v77 = vpop.xlane.xlu0 %76
    %v78 = vsel %vm41, %v37, -inf
    %79 = vmax.xlane.f32.xlu0 %v78
    %v80 = vpop.xlane.xlu0 %79
    %v81 = vsel %vm41, %v38, -inf
    %82 = vmax.xlane.f32.xlu0 %v81
    %v83 = vpop.xlane.xlu0 %82
    %v84 = vsel %vm41, %v39, -inf
    %85 = vmax.xlane.f32.xlu0 %v84
    %v86 = vpop.xlane.xlu0 %85
    %v87 = vsel %vm41, %v40, -inf
    %88 = vmax.xlane.f32.xlu0 %v87
    %v89 = vpop.xlane.xlu0 %88
    %v106 = vlaneseq
    %v107 = vand.u32 %v106, 127
    %v108 = vperm.slane %v44, %v107
    %v109 = vadd.s32 %v107, 4294967288
    %v110 = vperm.slane %v47, %v109
    %vm111 = vcmask 130112
    %v112 = vsel %vm111, %v110, %v108
    %v113 = vperm.slane %v50, %v107
    %v114 = vperm.slane %v53, %v109
    %v115 = vsel %vm111, %v114, %v113
    %v116 = vperm.slane %v56, %v107
    %v117 = vperm.slane %v59, %v109
    %v118 = vsel %vm111, %v117, %v116
    %v119 = vperm.slane %v62, %v107
    %v120 = vperm.slane %v65, %v109
    %v121 = vsel %vm111, %v120, %v119
    %v122 = vperm.slane %v68, %v107
    %v123 = vperm.slane %v71, %v109
    %v124 = vsel %vm111, %v123, %v122
    %v125 = vperm.slane %v74, %v107
    %v126 = vperm.slane %v77, %v109
    %v127 = vsel %vm111, %v126, %v125
    %v128 = vperm.slane %v80, %v107
    %v129 = vperm.slane %v83, %v109
    %v130 = vsel %vm111, %v129, %v128
    %v131 = vperm.slane %v86, %v107
    %v132 = vperm.slane %v89, %v109
    %v133 = vsel %vm111, %v132, %v131
    %vm134 = vcmask 1041409
    %v135 = vsel %vm134, %v115, %v112
    %vm136 = vcmask 1042434
    %v137 = vsel %vm136, %v118, %v135
    %vm138 = vcmask 1043459
    %v139 = vsel %vm138, %v121, %v137
    %vm140 = vcmask 1044484
    %v141 = vsel %vm140, %v124, %v139
    %vm142 = vcmask 1045509
    %v143 = vsel %vm142, %v127, %v141
    %vm144 = vcmask 1046534
    %v145 = vsel %vm144, %v130, %v143
    %vm146 = vcmask 1047559
    %v147 = vsel %vm146, %v133, %v145
    %149 = vst.msk [vmem:[#allocation5] sm:$0xff] %vm41, %v147
    // Predicated region
    $region10: #{tpu_custom_call.1} parent=1 // pred_check
      _
    $region11: #{tpu_custom_call.1} parent=1 // pred_check_branch
      %151 = sbr.rel (0) target = $region13
    $region12: #{tpu_custom_call.1} parent=1 // pred_region
      %153 = vsyncadd [#allocation4], 0
      %s155 = sshll.u32 [#allocation5], 4
      %s156 = int_to_ptr.vmem [resolvable:$true] %s155
      %s157 = sshll.u32 %s1, 4
      %s158 = int_to_ptr.hbm [resolvable:$true] %s157
      %160 = dma.vmem_to_hbm [thread:$0]  %s156, 128, %s158, [#allocation4]
    $region13: #{tpu_custom_call.1} parent=1 // pred_fallthru
      _
    // Predicated region
    $region14: #{tpu_custom_call.1} parent=1 // pred_check
      _
    $region15: #{tpu_custom_call.1} parent=1 // pred_check_branch
      %162 = sbr.rel (0) target = $region17
    $region16: #{tpu_custom_call.1} parent=1 // pred_region
      %164 = dma.done [#allocation4], 128
    $region17: #{tpu_custom_call.1} parent=1 // pred_fallthru
      _
    %165 = vsyncpa [#allocation3], 1
    %166 = vsyncpa [#allocation4], 1

</llo_original>
